<compile_context>
chip_gen: v5e
topology: v5e:2x2
jax: 0.10.0
libtpu: 0.0.40
codegen_flags: <defaults>
</compile_context>

<pallas_src>
import jax
import jax.numpy as jnp
from jax.experimental import pallas as pl
from jax.experimental.pallas import tpu as pltpu


def _round_up(x, m):
    return ((x + m - 1) // m) * m


def _physics_forward_kernel(params_ref, basis_ref, out_ref):
    # params_ref: (tile_n, K)   normalized parameters, last column is ones
    # basis_ref:  (K, tile_t)   basis pre-scaled by (q_max - q_min); last row = q_min @ basis
    # out_ref:    (tile_n, tile_t) synthesized samples
    p = params_ref[...]
    b = basis_ref[...]
    k = p.shape[1]                      # K = M + 1 (static)
    m = k - 1
    if m <= 16:
        # Tiny contraction dim: the MXU would pad K to 128/256, so do the
        # superposition as M broadcast FMAs on the VPU (trace-time branch).
        # Start from the bias row (the ones column of p is implicit here).
        acc = jnp.broadcast_to(b[m:m + 1, :], (p.shape[0], b.shape[1]))
        for i in range(m):
            acc = acc + p[:, i:i + 1] * b[i:i + 1, :]
        out_ref[...] = acc.astype(out_ref.dtype)
    else:
        # Bias is folded into the dot via the ones column / extra basis row.
        out_ref[...] = jnp.dot(
            p, b, preferred_element_type=jnp.float32).astype(out_ref.dtype)


def physics_model_forward(parameters, q_min, q_max, basis, *,
                          out_dtype=jnp.float32,
                          tile_n=None, tile_t_max=2048,
                          vmem_budget_bytes=None):
    """Pallas forward pass of the (concrete, linear-basis) PhysicsModel.

    parameters: [N, M] float32 in [0, 1]
    q_min, q_max: [M] float32 quantity ranges (param_to_quantity bounds)
    basis: [M, T] float32 basis signals
    returns: [N, T] samples in `out_dtype` (float32 by default)
    """
    parameters = jnp.asarray(parameters, jnp.float32)
    basis = jnp.asarray(basis, jnp.float32)
    q_min = jnp.asarray(q_min, jnp.float32)
    q_max = jnp.asarray(q_max, jnp.float32)

    N, M = parameters.shape
    M2, T = basis.shape
    assert M == M2
    K = M + 1
    out_itemsize = jnp.dtype(out_dtype).itemsize

    # Fold param_to_quantity AND the bias into a single contraction:
    #   (p*(qmax-qmin)+qmin) @ basis
    #     = [p, 1] @ concat((qmax-qmin)[:,None]*basis, qmin@basis)
    scaled_basis = (q_max - q_min)[:, None] * basis              # (M, T)
    offset_row = q_min[None, :] @ basis                          # (1, T)
    basis_aug = jnp.concatenate([scaled_basis, offset_row], axis=0)          # (K, T)
    params_aug = jnp.concatenate(
        [parameters, jnp.ones((N, 1), jnp.float32)], axis=1)                 # (N, K)

    # ---- chip-aware VMEM budget --------------------------------------------
    if vmem_budget_bytes is None:
        try:
            vmem_cap = int(pltpu.get_tpu_info().vmem_capacity_bytes)
        except Exception:
            vmem_cap = 64 * 1024 * 1024       # conservative (v7x per-TC size)
        vmem_budget_bytes = min(48 * 1024 * 1024, vmem_cap // 2)
    vmem_budget_bytes = int(vmem_budget_bytes)

    # ---- T tiling ------------------------------------------------------------
    # Lane-dense 128-multiple tiles up to tile_t_max; the grid uses cdiv so the
    # (possibly narrower) edge block is masked by Pallas — no wrapper pad/slice.
    tile_t_max = max(128, (int(tile_t_max) // 128) * 128)
    if T % 128 == 0:
        tile_t = min(T, tile_t_max)
    elif T <= 256:
        tile_t = T                            # full-dim block (always legal)
    else:
        tile_t = min((T // 128) * 128, tile_t_max)

    # ---- N tiling ------------------------------------------------------------
    if tile_n is None:
        tile_n = 512 if vmem_budget_bytes <= 32 * 1024 * 1024 else 1024
    tile_n = max(8, (int(tile_n) // 8) * 8)
    if N < tile_n:
        # Single N step. No forced 2-way split: it is pure serial-loop overhead
        # on 1-TC v5e/v6e, and on v7x large problems already have grid_t >= 2
        # (or grid_n >= 2) "parallel" steps for the second TensorCore.
        tile_n = N

    def vmem_fits(tn, tt):
        # Double-buffered tiles, accounting for (8,128) layout padding of the
        # narrow params (lane-padded to 128) and basis (sublane-padded to 8).
        params_b = 2 * tn * _round_up(K, 128) * 4
        basis_b = 2 * _round_up(K, 8) * tt * 4
        out_b = 2 * tn * tt * out_itemsize
        return params_b + basis_b + out_b <= vmem_budget_bytes

    while tile_n > 8 and not vmem_fits(tile_n, tile_t):
        tile_n = max(8, _round_up(tile_n // 2, 8))

    grid_n = pl.cdiv(N, tile_n)
    grid_t = pl.cdiv(T, tile_t)

    cost = pl.CostEstimate(
        flops=2 * N * K * T,
        transcendentals=0,
        bytes_accessed=4 * (N * K + K * T) + N * T * out_itemsize,
    )

    out = pl.pallas_call(
        _physics_forward_kernel,
        out_shape=jax.ShapeDtypeStruct((N, T), out_dtype),
        grid_spec=pltpu.PrefetchScalarGridSpec(
            num_scalar_prefetch=0,
            # T outermost, N innermost: the basis block index is constant along
            # the inner loop, so each basis tile is DMA'd once per T tile.
            grid=(grid_t, grid_n),
            in_specs=[
                pl.BlockSpec((tile_n, K), lambda tj, ni: (ni, 0)),   # params (+ones)
                pl.BlockSpec((K, tile_t), lambda tj, ni: (0, tj)),   # scaled basis (+bias row)
            ],
            out_specs=pl.BlockSpec((tile_n, tile_t), lambda tj, ni: (ni, tj)),
        ),
        compiler_params=pltpu.CompilerParams(
            dimension_semantics=("parallel", "parallel"),
            vmem_limit_bytes=vmem_budget_bytes,
        ),
        cost_estimate=cost,
    )(params_aug, basis_aug)

    return out


def param_to_quantity(params, q_min, q_max):
    # plain-JAX glue: project [0,1] params into the physical range
    return params * (q_max - q_min)[None, :] + q_min[None, :]


def quantity_to_param(quantities, q_min, q_max):
    # plain-JAX glue: normalize quantities to [0,1]; inverse of param_to_quantity
    return (quantities - q_min[None, :]) / (q_max[None, :] - q_min[None, :])


if __name__ == "__main__":
    # TODO(synk): the source class is an abstract interface (all methods raise
    # NotImplementedError); the linear-basis synthesis above is one deterministic
    # concrete instantiation of its documented contract.
    key = jax.random.PRNGKey(0)
    k1, k2 = jax.random.split(key)

    N, M, T = 50, 4, 256          # samples (deliberately ragged), parameters, signal length

    parameters = jax.random.uniform(k1, (N, M), dtype=jnp.float32)   # in [0, 1]

    # Deterministic parameter ranges and basis signals (synthetic "physics").
    q_min = jnp.array([0.0, 1.0, -2.0, 0.5], dtype=jnp.float32)
    q_max = jnp.array([1.0, 3.0, 2.0, 4.5], dtype=jnp.float32)

    t = jnp.arange(T, dtype=jnp.float32) / T
    freqs = jnp.arange(1, M + 1, dtype=jnp.float32)                  # (M,)
    basis = jnp.sin(2.0 * jnp.pi * freqs[:, None] * t[None, :])      # (M, T)
    basis = basis + 0.01 * jax.random.normal(k2, (M, T), dtype=jnp.float32)

    out = physics_model_forward(parameters, q_min, q_max, basis)
    out = jax.block_until_ready(out)

    # Reference check in plain JAX (the folded form changes FP associativity slightly).
    quantities = param_to_quantity(parameters, q_min, q_max)
    ref = quantities @ basis
    assert out.shape == (N, T)
    assert jnp.allclose(out, ref, atol=1e-4, rtol=1e-4)

    # Round-trip check of the (de)normalization contract.
    p_back = quantity_to_param(quantities, q_min, q_max)
    assert jnp.allclose(p_back, parameters, atol=1e-5)

    print("KERNEL_OK")
</pallas_src>

<mosaic_0001>
module attributes {stable_mosaic.version = 11 : i64} {
  func.func @_physics_forward_kernel(%arg0: i32, %arg1: i32, %arg2: memref<50x5xf32, #tpu.memory_space<vmem>>, %arg3: memref<5x256xf32, #tpu.memory_space<vmem>>, %arg4: memref<50x256xf32, #tpu.memory_space<vmem>>) attributes {dimension_semantics = [#tpu.dimension_semantics<parallel>, #tpu.dimension_semantics<parallel>], iteration_bounds = array<i64: 1, 1>, scalar_prefetch = 0 : i64, scratch_operands = 0 : i64, tpu.core_type = #tpu.core_type<tc>, window_params = [{transform_indices = @transform_0, window_bounds = array<i64: 50, 5>}, {transform_indices = @transform_1, window_bounds = array<i64: 5, 256>}, {transform_indices = @transform_2, window_bounds = array<i64: 50, 256>}]} {
    %c0 = arith.constant 0 : index
    %c0_0 = arith.constant 0 : index
    %0 = vector.load %arg2[%c0, %c0_0] : memref<50x5xf32, #tpu.memory_space<vmem>>, vector<50x5xf32>
    %c0_1 = arith.constant 0 : index
    %c0_2 = arith.constant 0 : index
    %1 = vector.load %arg3[%c0_1, %c0_2] : memref<5x256xf32, #tpu.memory_space<vmem>>, vector<5x256xf32>
    %2 = vector.extract_strided_slice %1 {offsets = [4, 0], sizes = [1, 256], strides = [1, 1]} : vector<5x256xf32> to vector<1x256xf32>
    %3 = vector.shape_cast %2 : vector<1x256xf32> to vector<1x256xf32>
    %4 = vector.broadcast %3 : vector<1x256xf32> to vector<50x256xf32>
    %5 = vector.extract_strided_slice %0 {offsets = [0, 0], sizes = [50, 1], strides = [1, 1]} : vector<50x5xf32> to vector<50x1xf32>
    %6 = vector.extract_strided_slice %1 {offsets = [0, 0], sizes = [1, 256], strides = [1, 1]} : vector<5x256xf32> to vector<1x256xf32>
    %7 = vector.broadcast %5 : vector<50x1xf32> to vector<50x256xf32>
    %8 = vector.broadcast %6 : vector<1x256xf32> to vector<50x256xf32>
    %9 = arith.mulf %7, %8 : vector<50x256xf32>
    %10 = arith.addf %4, %9 : vector<50x256xf32>
    %11 = vector.extract_strided_slice %0 {offsets = [0, 1], sizes = [50, 1], strides = [1, 1]} : vector<50x5xf32> to vector<50x1xf32>
    %12 = vector.extract_strided_slice %1 {offsets = [1, 0], sizes = [1, 256], strides = [1, 1]} : vector<5x256xf32> to vector<1x256xf32>
    %13 = vector.broadcast %11 : vector<50x1xf32> to vector<50x256xf32>
    %14 = vector.broadcast %12 : vector<1x256xf32> to vector<50x256xf32>
    %15 = arith.mulf %13, %14 : vector<50x256xf32>
    %16 = arith.addf %10, %15 : vector<50x256xf32>
    %17 = vector.extract_strided_slice %0 {offsets = [0, 2], sizes = [50, 1], strides = [1, 1]} : vector<50x5xf32> to vector<50x1xf32>
    %18 = vector.extract_strided_slice %1 {offsets = [2, 0], sizes = [1, 256], strides = [1, 1]} : vector<5x256xf32> to vector<1x256xf32>
    %19 = vector.broadcast %17 : vector<50x1xf32> to vector<50x256xf32>
    %20 = vector.broadcast %18 : vector<1x256xf32> to vector<50x256xf32>
    %21 = arith.mulf %19, %20 : vector<50x256xf32>
    %22 = arith.addf %16, %21 : vector<50x256xf32>
    %23 = vector.extract_strided_slice %0 {offsets = [0, 3], sizes = [50, 1], strides = [1, 1]} : vector<50x5xf32> to vector<50x1xf32>
    %24 = vector.extract_strided_slice %1 {offsets = [3, 0], sizes = [1, 256], strides = [1, 1]} : vector<5x256xf32> to vector<1x256xf32>
    %25 = vector.broadcast %23 : vector<50x1xf32> to vector<50x256xf32>
    %26 = vector.broadcast %24 : vector<1x256xf32> to vector<50x256xf32>
    %27 = arith.mulf %25, %26 : vector<50x256xf32>
    %28 = arith.addf %22, %27 : vector<50x256xf32>
    %c0_3 = arith.constant 0 : index
    %c0_4 = arith.constant 0 : index
    %29 = vector.load %arg4[%c0_3, %c0_4] : memref<50x256xf32, #tpu.memory_space<vmem>>, vector<50x256xf32>
    tpu.vector_store %arg4[%c0_3, %c0_4], %28 {strides = array<i32>} : memref<50x256xf32, #tpu.memory_space<vmem>>, vector<50x256xf32>,
    return
  }
  func.func @transform_0(%arg0: i32, %arg1: i32) -> (i32, i32) {
    %c0_i32 = arith.constant 0 : i32
    %c0_i32_0 = arith.constant 0 : i32
    return %arg1, %c0_i32 : i32, i32
  }
  func.func @transform_1(%arg0: i32, %arg1: i32) -> (i32, i32) {
    %c0_i32 = arith.constant 0 : i32
    %c0_i32_0 = arith.constant 0 : i32
    return %c0_i32, %arg0 : i32, i32
  }
  func.func @transform_2(%arg0: i32, %arg1: i32) -> (i32, i32) {
    %c0_i32 = arith.constant 0 : i32
    return %arg1, %arg0 : i32, i32
  }
}

</mosaic_0001>

<llo_original>
// kernel: tpu_custom_call.1
$region0: #{tpu_custom_call.1}
  #allocation0 [shape = 'u32[]', space=smem, size = 0x4, offset = 0x4, fixed_abs, tag = 'smem constant byte address 0x4 - core index']
  #allocation1 [shape = 'u32[72,128]{1,0:T(1,128)}', space=vmem, size = 0x9000, scoped, tag = 'internal scratch']
  %s0 = inlined_call_operand.vmem [shape: f32[50,5], index: 0, kind: input, shape index: {}]
  %s1 = inlined_call_operand.vmem [shape: f32[5,256], index: 1, kind: input, shape index: {}]
  %s2 = inlined_call_operand.hbm [shape: f32[50,256], index: 2, kind: output, shape index: {}]
  %s3 = sld [smem:[#allocation0]]
  $region18: #{tpu_custom_call.1} parent=0
    _
  %s5 = ssub.s32 1, %s3
  %s6 = scalar_select 0, %s5, %s3
  $region1: #{tpu_custom_call.1} parent=0
    #allocation2 [shape = 'u8[57344]{0}', space=vmem, size = 0xe000, scoped, tag = 'output window, operand 0, single buffered']
    #allocation3 [shape = 's32[1]{0}', space=sflag, size = 0x4, scoped, tag = 'scoped memory for tpu_custom_call.1']
    %7 = vsyncpa [#allocation3], 0
    // Predicated region
    $region2: #{tpu_custom_call.1} parent=1 // pred_check
      _
    $region3: #{tpu_custom_call.1} parent=1 // pred_check_branch
      %9 = sbr.rel (0) target = $region5
    $region4: #{tpu_custom_call.1} parent=1 // pred_region
      _
    $region5: #{tpu_custom_call.1} parent=1 // pred_fallthru
      _
    // Predicated region
    $region6: #{tpu_custom_call.1} parent=1 // pred_check
      _
    $region7: #{tpu_custom_call.1} parent=1 // pred_check_branch
      %11 = sbr.rel (0) target = $region9
    $region8: #{tpu_custom_call.1} parent=1 // pred_region
      _
    $region9: #{tpu_custom_call.1} parent=1 // pred_fallthru
      _
    %v12 = vld [vmem:[%s0] sm:$0xff]
    %v13 = vld [vmem:[%s0 + $0x8] sm:$0xff]
    %v14 = vld [vmem:[%s0 + $0x10] sm:$0xff]
    %v15 = vld [vmem:[%s0 + $0x18] sm:$0xff]
    %v16 = vld [vmem:[%s0 + $0x20] sm:$0xff]
    %v17 = vld [vmem:[%s0 + $0x28] sm:$0xff]
    %v18 = vld [vmem:[%s0 + $0x30] sm:$0x3]
    %v19 = vld [vmem:[%s1] sm:$0x1f]
    %v20 = vld [vmem:[%s1 + $0x8] sm:$0x1f]
    %v21 = vperm.slane %v19, 4
    %v22 = vperm.slane %v20, 4
    %24 = vset.pattern.permute.xlu0 0
    %25 = vperm.xlu0 %24, %v12
    %v26 = vpop.permute.xlu0 %25
    %29 = vset.pattern.permute.xlu0 0
    %30 = vperm.xlu0 %29, %v13
    %v31 = vpop.permute.xlu0 %30
    %34 = vset.pattern.permute.xlu0 0
    %35 = vperm.xlu0 %34, %v14
    %v36 = vpop.permute.xlu0 %35
    %39 = vset.pattern.permute.xlu0 0
    %40 = vperm.xlu0 %39, %v15
    %v41 = vpop.permute.xlu0 %40
    %44 = vset.pattern.permute.xlu0 0
    %45 = vperm.xlu0 %44, %v16
    %v46 = vpop.permute.xlu0 %45
    %49 = vset.pattern.permute.xlu0 0
    %50 = vperm.xlu0 %49, %v17
    %v51 = vpop.permute.xlu0 %50
    %54 = vset.pattern.permute.xlu0 0
    %55 = vperm.xlu0 %54, %v18
    %v56 = vpop.permute.xlu0 %55
    %v58 = vperm.slane %v19, 0
    %v59 = vperm.slane %v20, 0
    %v60 = vmul.f32 %v26, %v58
    %v61 = vmul.f32 %v26, %v59
    %v62 = vmul.f32 %v31, %v58
    %v63 = vmul.f32 %v31, %v59
    %v64 = vmul.f32 %v36, %v58
    %v65 = vmul.f32 %v36, %v59
    %v66 = vmul.f32 %v41, %v58
    %v67 = vmul.f32 %v41, %v59
    %v68 = vmul.f32 %v46, %v58
    %v69 = vmul.f32 %v46, %v59
    %v70 = vmul.f32 %v51, %v58
    %v71 = vmul.f32 %v51, %v59
    %v72 = vmul.f32 %v56, %v58
    %v73 = vmul.f32 %v56, %v59
    %v74 = vadd.f32 %v21, %v60
    %v75 = vadd.f32 %v22, %v61
    %v76 = vadd.f32 %v21, %v62
    %v77 = vadd.f32 %v22, %v63
    %v78 = vadd.f32 %v21, %v64
    %v79 = vadd.f32 %v22, %v65
    %v80 = vadd.f32 %v21, %v66
    %v81 = vadd.f32 %v22, %v67
    %v82 = vadd.f32 %v21, %v68
    %v83 = vadd.f32 %v22, %v69
    %v84 = vadd.f32 %v21, %v70
    %v85 = vadd.f32 %v22, %v71
    %v86 = vadd.f32 %v21, %v72
    %v87 = vadd.f32 %v22, %v73
    %88 = vset.pattern.permute.xlu0 1
    %89 = vperm.xlu0 %88, %v12
    %v90 = vpop.permute.xlu0 %89
    %92 = vset.pattern.permute.xlu0 1
    %93 = vperm.xlu0 %92, %v13
    %v94 = vpop.permute.xlu0 %93
    %96 = vset.pattern.permute.xlu0 1
    %97 = vperm.xlu0 %96, %v14
    %v98 = vpop.permute.xlu0 %97
    %100 = vset.pattern.permute.xlu0 1
    %101 = vperm.xlu0 %100, %v15
    %v102 = vpop.permute.xlu0 %101
    %104 = vset.pattern.permute.xlu0 1
    %105 = vperm.xlu0 %104, %v16
    %v106 = vpop.permute.xlu0 %105
    %108 = vset.pattern.permute.xlu0 1
    %109 = vperm.xlu0 %108, %v17
    %v110 = vpop.permute.xlu0 %109
    %112 = vset.pattern.permute.xlu0 1
    %113 = vperm.xlu0 %112, %v18
    %v114 = vpop.permute.xlu0 %113
    %v116 = vperm.slane %v19, 1
    %v117 = vperm.slane %v20, 1
    %v118 = vmul.f32 %v90, %v116
    %v119 = vmul.f32 %v90, %v117
    %v120 = vmul.f32 %v94, %v116
    %v121 = vmul.f32 %v94, %v117
    %v122 = vmul.f32 %v98, %v116
    %v123 = vmul.f32 %v98, %v117
    %v124 = vmul.f32 %v102, %v116
    %v125 = vmul.f32 %v102, %v117
    %v126 = vmul.f32 %v106, %v116
    %v127 = vmul.f32 %v106, %v117
    %v128 = vmul.f32 %v110, %v116
    %v129 = vmul.f32 %v110, %v117
    %v130 = vmul.f32 %v114, %v116
    %v131 = vmul.f32 %v114, %v117
    %v132 = vadd.f32 %v74, %v118
    %v133 = vadd.f32 %v75, %v119
    %v134 = vadd.f32 %v76, %v120
    %v135 = vadd.f32 %v77, %v121
    %v136 = vadd.f32 %v78, %v122
    %v137 = vadd.f32 %v79, %v123
    %v138 = vadd.f32 %v80, %v124
    %v139 = vadd.f32 %v81, %v125
    %v140 = vadd.f32 %v82, %v126
    %v141 = vadd.f32 %v83, %v127
    %v142 = vadd.f32 %v84, %v128
    %v143 = vadd.f32 %v85, %v129
    %v144 = vadd.f32 %v86, %v130
    %v145 = vadd.f32 %v87, %v131
    %146 = vset.pattern.permute.xlu0 2
    %147 = vperm.xlu0 %146, %v12
    %v148 = vpop.permute.xlu0 %147
    %150 = vset.pattern.permute.xlu0 2
    %151 = vperm.xlu0 %150, %v13
    %v152 = vpop.permute.xlu0 %151
    %154 = vset.pattern.permute.xlu0 2
    %155 = vperm.xlu0 %154, %v14
    %v156 = vpop.permute.xlu0 %155
    %158 = vset.pattern.permute.xlu0 2
    %159 = vperm.xlu0 %158, %v15
    %v160 = vpop.permute.xlu0 %159
    %162 = vset.pattern.permute.xlu0 2
    %163 = vperm.xlu0 %162, %v16
    %v164 = vpop.permute.xlu0 %163
    %166 = vset.pattern.permute.xlu0 2
    %167 = vperm.xlu0 %166, %v17
    %v168 = vpop.permute.xlu0 %167
    %170 = vset.pattern.permute.xlu0 2
    %171 = vperm.xlu0 %170, %v18
    %v172 = vpop.permute.xlu0 %171
    %v174 = vperm.slane %v19, 2
    %v175 = vperm.slane %v20, 2
    %v176 = vmul.f32 %v148, %v174
    %v177 = vmul.f32 %v148, %v175
    %v178 = vmul.f32 %v152, %v174
    %v179 = vmul.f32 %v152, %v175
    %v180 = vmul.f32 %v156, %v174
    %v181 = vmul.f32 %v156, %v175
    %v182 = vmul.f32 %v160, %v174
    %v183 = vmul.f32 %v160, %v175
    %v184 = vmul.f32 %v164, %v174
    %v185 = vmul.f32 %v164, %v175
    %v186 = vmul.f32 %v168, %v174
    %v187 = vmul.f32 %v168, %v175
    %v188 = vmul.f32 %v172, %v174
    %v189 = vmul.f32 %v172, %v175
    %v190 = vadd.f32 %v132, %v176
    %v191 = vadd.f32 %v133, %v177
    %v192 = vadd.f32 %v134, %v178
    %v193 = vadd.f32 %v135, %v179
    %v194 = vadd.f32 %v136, %v180
    %v195 = vadd.f32 %v137, %v181
    %v196 = vadd.f32 %v138, %v182
    %v197 = vadd.f32 %v139, %v183
    %v198 = vadd.f32 %v140, %v184
    %v199 = vadd.f32 %v141, %v185
    %v200 = vadd.f32 %v142, %v186
    %v201 = vadd.f32 %v143, %v187
    %v202 = vadd.f32 %v144, %v188
    %v203 = vadd.f32 %v145, %v189
    %204 = vset.pattern.permute.xlu0 3
    %205 = vperm.xlu0 %204, %v12
    %v206 = vpop.permute.xlu0 %205
    %208 = vset.pattern.permute.xlu0 3
    %209 = vperm.xlu0 %208, %v13
    %v210 = vpop.permute.xlu0 %209
    %212 = vset.pattern.permute.xlu0 3
    %213 = vperm.xlu0 %212, %v14
    %v214 = vpop.permute.xlu0 %213
    %216 = vset.pattern.permute.xlu0 3
    %217 = vperm.xlu0 %216, %v15
    %v218 = vpop.permute.xlu0 %217
    %220 = vset.pattern.permute.xlu0 3
    %221 = vperm.xlu0 %220, %v16
    %v222 = vpop.permute.xlu0 %221
    %224 = vset.pattern.permute.xlu0 3
    %225 = vperm.xlu0 %224, %v17
    %v226 = vpop.permute.xlu0 %225
    %228 = vset.pattern.permute.xlu0 3
    %229 = vperm.xlu0 %228, %v18
    %v230 = vpop.permute.xlu0 %229
    %v232 = vperm.slane %v19, 3
    %v233 = vperm.slane %v20, 3
    %v234 = vmul.f32 %v206, %v232
    %v235 = vmul.f32 %v206, %v233
    %v236 = vmul.f32 %v210, %v232
    %v237 = vmul.f32 %v210, %v233
    %v238 = vmul.f32 %v214, %v232
    %v239 = vmul.f32 %v214, %v233
    %v240 = vmul.f32 %v218, %v232
    %v241 = vmul.f32 %v218, %v233
    %v242 = vmul.f32 %v222, %v232
    %v243 = vmul.f32 %v222, %v233
    %v244 = vmul.f32 %v226, %v232
    %v245 = vmul.f32 %v226, %v233
    %v246 = vmul.f32 %v230, %v232
    %v247 = vmul.f32 %v230, %v233
    %v248 = vadd.f32 %v190, %v234
    %v249 = vadd.f32 %v191, %v235
    %v250 = vadd.f32 %v192, %v236
    %v251 = vadd.f32 %v193, %v237
    %v252 = vadd.f32 %v194, %v238
    %v253 = vadd.f32 %v195, %v239
    %v254 = vadd.f32 %v196, %v240
    %v255 = vadd.f32 %v197, %v241
    %v256 = vadd.f32 %v198, %v242
    %v257 = vadd.f32 %v199, %v243
    %v258 = vadd.f32 %v200, %v244
    %v259 = vadd.f32 %v201, %v245
    %v260 = vadd.f32 %v202, %v246
    %v261 = vadd.f32 %v203, %v247
    %262 = vst [vmem:[#allocation2] sm:$0xff] %v248
    %263 = vst [vmem:[#allocation2 + $0x8] sm:$0xff] %v249
    %264 = vst [vmem:[#allocation2 + $0x10] sm:$0xff] %v250
    %265 = vst [vmem:[#allocation2 + $0x18] sm:$0xff] %v251
    %266 = vst [vmem:[#allocation2 + $0x20] sm:$0xff] %v252
    %267 = vst [vmem:[#allocation2 + $0x28] sm:$0xff] %v253
    %268 = vst [vmem:[#allocation2 + $0x30] sm:$0xff] %v254
    %269 = vst [vmem:[#allocation2 + $0x38] sm:$0xff] %v255
    %270 = vst [vmem:[#allocation2 + $0x40] sm:$0xff] %v256
    %271 = vst [vmem:[#allocation2 + $0x48] sm:$0xff] %v257
    %272 = vst [vmem:[#allocation2 + $0x50] sm:$0xff] %v258
    %273 = vst [vmem:[#allocation2 + $0x58] sm:$0xff] %v259
    %274 = vst [vmem:[#allocation2 + $0x60] sm:$0x3] %v260
    %275 = vst [vmem:[#allocation2 + $0x68] sm:$0x3] %v261
    // Predicated region
    $region10: #{tpu_custom_call.1} parent=1 // pred_check
      _
    $region11: #{tpu_custom_call.1} parent=1 // pred_check_branch
      %277 = sbr.rel (0) target = $region13
    $region12: #{tpu_custom_call.1} parent=1 // pred_region
      %279 = vsyncadd [#allocation3], 0
      %s280 = sshll.u32 [#allocation2], 4
      %s281 = int_to_ptr.vmem [resolvable:$true] %s280
      %s282 = sshll.u32 %s2, 4
      %s283 = int_to_ptr.hbm [resolvable:$true] %s282
      %288 = dma.vmem_to_hbm [thread:$0]  %s281, 1792, %s283, [#allocation3], 256, 256, 16
    $region13: #{tpu_custom_call.1} parent=1 // pred_fallthru
      _
    // Predicated region
    $region14: #{tpu_custom_call.1} parent=1 // pred_check
      _
    $region15: #{tpu_custom_call.1} parent=1 // pred_check_branch
      %290 = sbr.rel (0) target = $region17
    $region16: #{tpu_custom_call.1} parent=1 // pred_region
      %292 = dma.done [#allocation3], 1792
    $region17: #{tpu_custom_call.1} parent=1 // pred_fallthru
      _
    %293 = vsyncpa [#allocation3], 1

</llo_original>
